<compile_context>
chip_gen: v6e
topology: v6e:2x2x1
jax: 0.10.0
libtpu: 0.0.40
codegen_flags: <defaults>
</compile_context>

<pallas_src>
import functools

import jax
import jax.numpy as jnp
from jax.experimental import pallas as pl
from jax.experimental.pallas import tpu as pltpu


def _dice_kernel(x_ref, t_ref, num_ref, den_ref, *, softmax, hw, tile_m):
    # x_ref / t_ref: (1, C, tile_m) tile of the (N, C, H*W) view.
    # num_ref / den_ref: (1, C, 1) per-batch accumulators, resident across the
    # inner (tile) grid axis.
    i = pl.program_id(1)

    @pl.when(i == 0)
    def _():
        num_ref[...] = jnp.zeros_like(num_ref)
        den_ref[...] = jnp.zeros_like(den_ref)

    x = x_ref[0].astype(jnp.float32)  # (C, tile_m)
    t = t_ref[0].astype(jnp.float32)  # (C, tile_m)

    if hw % tile_m != 0:
        # Ragged tail: columns past the true H*W come from an out-of-bounds
        # block region (unspecified contents) -> mask them BEFORE the exp.
        col = i * tile_m + jax.lax.broadcasted_iota(jnp.int32, (1, tile_m), 1)
        valid = col < hw
        x = jnp.where(valid, x, 0.0)
        t = jnp.where(valid, t, 0.0)
    else:
        valid = None

    if softmax:
        m = jnp.max(x, axis=0, keepdims=True)            # cross-sublane reduce
        e = jnp.exp(x - m)
        p = e * pl.reciprocal(jnp.sum(e, axis=0, keepdims=True), approx=False)
        if valid is not None:
            p = jnp.where(valid, p, 0.0)                  # kill padded columns
    else:
        p = x

    num_ref[0] += 2.0 * jnp.sum(p * t, axis=1, keepdims=True)  # (C, 1)
    den_ref[0] += jnp.sum(p + t, axis=1, keepdims=True)        # (C, 1)


def my_dice_score(inputs, targets, *, softmax=True, weights=None,
                  epsilon=1e-5, tile_m=8192):
    """Mean Dice score over channels, matching MyDiceScore.forward (NCHW)."""
    N, C, H, W = inputs.shape
    assert targets.shape == inputs.shape
    HW = H * W

    # NOTE: the PyTorch module builds `weights` (ones) and broadcasts it but
    # never applies it to the result -- reproduced exactly (intentionally
    # unused); callers passing non-unit weights will see no effect.
    if weights is None:
        weights = jnp.ones((C,), dtype=jnp.float32)
    _ = weights[None, :, None, None]

    # Free views (contiguous): NCHW -> (N, C, H*W).
    x = inputs.reshape(N, C, HW)
    t = targets.reshape(N, C, HW)

    # Lane tile: multiple of 128, no larger than needed, and small enough that
    # the double-buffered input blocks stay well inside the default scoped
    # VMEM on every generation (v5e 16 MiB, v6e/v7x 32 MiB scoped).
    tm = max(128, (min(tile_m, pl.cdiv(HW, 128) * 128) // 128) * 128)
    vmem_budget = 12 * 1024 * 1024
    bytes_per_col = C * (inputs.dtype.itemsize + targets.dtype.itemsize)
    max_tm = max(128, (vmem_budget // (2 * bytes_per_col)) // 128 * 128)
    tm = min(tm, max_tm)

    grid = (N, pl.cdiv(HW, tm))

    kernel = functools.partial(_dice_kernel, softmax=softmax, hw=HW, tile_m=tm)

    num, den = pl.pallas_call(
        kernel,
        out_shape=(
            jax.ShapeDtypeStruct((N, C, 1), jnp.float32),
            jax.ShapeDtypeStruct((N, C, 1), jnp.float32),
        ),
        grid_spec=pltpu.PrefetchScalarGridSpec(
            num_scalar_prefetch=0,
            grid=grid,
            in_specs=[
                pl.BlockSpec((1, C, tm), lambda n, i: (n, 0, i)),
                pl.BlockSpec((1, C, tm), lambda n, i: (n, 0, i)),
            ],
            out_specs=[
                pl.BlockSpec((1, C, 1), lambda n, i: (n, 0, 0)),
                pl.BlockSpec((1, C, 1), lambda n, i: (n, 0, 0)),
            ],
        ),
        compiler_params=pltpu.CompilerParams(
            dimension_semantics=("parallel", "arbitrary")),
    )(x, t)

    # Tiny (N, C) partials -> per-channel totals -> mean dice.
    num = jnp.sum(num[:, :, 0], axis=0)  # (C,)
    den = jnp.sum(den[:, :, 0], axis=0)  # (C,)
    return jnp.mean(num / (den + epsilon))


def _reference(inputs, targets, *, softmax=True, epsilon=1e-5):
    x = jax.nn.softmax(inputs, axis=1) if softmax else inputs
    num = 2.0 * jnp.sum(x * targets, axis=(0, 2, 3))
    den = jnp.sum(x + targets, axis=(0, 2, 3)) + epsilon
    return jnp.mean(num / den)


if __name__ == "__main__":
    key = jax.random.PRNGKey(0)
    k1, k2 = jax.random.split(key)
    N, C, H, W = 2, 4, 16, 16
    inputs = jax.random.normal(k1, (N, C, H, W), dtype=jnp.float32)
    # one-hot targets (typical segmentation labels)
    labels = jax.random.randint(k2, (N, H, W), 0, C)
    targets = jax.nn.one_hot(labels, C, axis=1, dtype=jnp.float32)

    out = my_dice_score(inputs, targets, softmax=True, epsilon=1e-5)
    out = jax.block_until_ready(out)

    ref = _reference(inputs, targets, softmax=True, epsilon=1e-5)
    assert jnp.allclose(out, ref, rtol=1e-5, atol=1e-6), (out, ref)
    print("KERNEL_OK")
</pallas_src>

<mosaic_0001>
module attributes {stable_mosaic.version = 11 : i64} {
  func.func @_dice_kernel(%arg0: i32, %arg1: i32, %arg2: memref<1x4x256xf32, #tpu.memory_space<vmem>>, %arg3: memref<1x4x256xf32, #tpu.memory_space<vmem>>, %arg4: memref<1x4x1xf32, #tpu.memory_space<vmem>>, %arg5: memref<1x4x1xf32, #tpu.memory_space<vmem>>) attributes {dimension_semantics = [#tpu.dimension_semantics<parallel>, #tpu.dimension_semantics<arbitrary>], iteration_bounds = array<i64: 2, 1>, scalar_prefetch = 0 : i64, scratch_operands = 0 : i64, tpu.core_type = #tpu.core_type<tc>, window_params = [{transform_indices = @transform_0, window_bounds = array<i64: 1, 4, 256>}, {transform_indices = @transform_1, window_bounds = array<i64: 1, 4, 256>}, {transform_indices = @transform_2, window_bounds = array<i64: 1, 4, 1>}, {transform_indices = @transform_3, window_bounds = array<i64: 1, 4, 1>}]} {
    %c0_i32 = arith.constant 0 : i32
    %0 = arith.cmpi eq, %arg1, %c0_i32 : i32
    %1 = arith.extui %0 : i1 to i32
    %c0_i32_0 = arith.constant 0 : i32
    %2 = arith.cmpi ne, %1, %c0_i32_0 : i32
    scf.if %2 {
      %cst_22 = arith.constant 0.000000e+00 : f32
      %37 = vector.broadcast %cst_22 : f32 to vector<1x4x1xf32>
      %c0_23 = arith.constant 0 : index
      %c0_24 = arith.constant 0 : index
      %c0_25 = arith.constant 0 : index
      %38 = vector.load %arg4[%c0_23, %c0_24, %c0_25] : memref<1x4x1xf32, #tpu.memory_space<vmem>>, vector<1x4x1xf32>
      tpu.vector_store %arg4[%c0_23, %c0_24, %c0_25], %37 {strides = array<i32>} : memref<1x4x1xf32, #tpu.memory_space<vmem>>, vector<1x4x1xf32>,
      %cst_26 = arith.constant 0.000000e+00 : f32
      %39 = vector.broadcast %cst_26 : f32 to vector<1x4x1xf32>
      %c0_27 = arith.constant 0 : index
      %c0_28 = arith.constant 0 : index
      %c0_29 = arith.constant 0 : index
      %40 = vector.load %arg5[%c0_27, %c0_28, %c0_29] : memref<1x4x1xf32, #tpu.memory_space<vmem>>, vector<1x4x1xf32>
      tpu.vector_store %arg5[%c0_27, %c0_28, %c0_29], %39 {strides = array<i32>} : memref<1x4x1xf32, #tpu.memory_space<vmem>>, vector<1x4x1xf32>,
    } else {
    }
    %c0 = arith.constant 0 : index
    %c0_1 = arith.constant 0 : index
    %c0_2 = arith.constant 0 : index
    %3 = vector.load %arg2[%c0, %c0_1, %c0_2] : memref<1x4x256xf32, #tpu.memory_space<vmem>>, vector<1x4x256xf32>
    %4 = vector.shape_cast %3 : vector<1x4x256xf32> to vector<4x256xf32>
    %c0_3 = arith.constant 0 : index
    %c0_4 = arith.constant 0 : index
    %c0_5 = arith.constant 0 : index
    %5 = vector.load %arg3[%c0_3, %c0_4, %c0_5] : memref<1x4x256xf32, #tpu.memory_space<vmem>>, vector<1x4x256xf32>
    %6 = vector.shape_cast %5 : vector<1x4x256xf32> to vector<4x256xf32>
    %cst = arith.constant dense<0xFF800000> : vector<256xf32>
    %7 = vector.multi_reduction <maximumf>, %4, %cst [0] : vector<4x256xf32> to vector<256xf32>
    %8 = vector.shape_cast %7 : vector<256xf32> to vector<1x256xf32>
    %9 = vector.broadcast %8 : vector<1x256xf32> to vector<4x256xf32>
    %10 = arith.subf %4, %9 : vector<4x256xf32>
    %11 = math.exp %10 : vector<4x256xf32>
    %cst_6 = arith.constant dense<0.000000e+00> : vector<256xf32>
    %12 = vector.multi_reduction <add>, %11, %cst_6 [0] : vector<4x256xf32> to vector<256xf32>
    %13 = vector.shape_cast %12 : vector<256xf32> to vector<1x256xf32>
    %14 = tpu.reciprocal %13 : vector<1x256xf32> -> vector<1x256xf32>
    %15 = vector.broadcast %14 : vector<1x256xf32> to vector<4x256xf32>
    %16 = arith.mulf %11, %15 : vector<4x256xf32>
    %c0_7 = arith.constant 0 : index
    %c0_8 = arith.constant 0 : index
    %c0_9 = arith.constant 0 : index
    %17 = vector.load %arg4[%c0_7, %c0_8, %c0_9] : memref<1x4x1xf32, #tpu.memory_space<vmem>>, vector<1x4x1xf32>
    %18 = vector.shape_cast %17 : vector<1x4x1xf32> to vector<4x1xf32>
    %19 = arith.mulf %16, %6 : vector<4x256xf32>
    %cst_10 = arith.constant dense<0.000000e+00> : vector<4xf32>
    %20 = vector.multi_reduction <add>, %19, %cst_10 [1] : vector<4x256xf32> to vector<4xf32>
    %21 = vector.shape_cast %20 : vector<4xf32> to vector<4x1xf32>
    %cst_11 = arith.constant 2.000000e+00 : f32
    %22 = vector.broadcast %cst_11 : f32 to vector<4x1xf32>
    %23 = arith.mulf %22, %21 : vector<4x1xf32>
    %24 = arith.addf %18, %23 : vector<4x1xf32>
    %c0_12 = arith.constant 0 : index
    %c0_13 = arith.constant 0 : index
    %c0_14 = arith.constant 0 : index
    %25 = vector.load %arg4[%c0_12, %c0_13, %c0_14] : memref<1x4x1xf32, #tpu.memory_space<vmem>>, vector<1x4x1xf32>
    %26 = vector.shape_cast %25 : vector<1x4x1xf32> to vector<4x1xf32>
    %27 = vector.shape_cast %24 : vector<4x1xf32> to vector<1x4x1xf32>
    tpu.vector_store %arg4[%c0_12, %c0_13, %c0_14], %27 {strides = array<i32>} : memref<1x4x1xf32, #tpu.memory_space<vmem>>, vector<1x4x1xf32>,
    %c0_15 = arith.constant 0 : index
    %c0_16 = arith.constant 0 : index
    %c0_17 = arith.constant 0 : index
    %28 = vector.load %arg5[%c0_15, %c0_16, %c0_17] : memref<1x4x1xf32, #tpu.memory_space<vmem>>, vector<1x4x1xf32>
    %29 = vector.shape_cast %28 : vector<1x4x1xf32> to vector<4x1xf32>
    %30 = arith.addf %16, %6 : vector<4x256xf32>
    %cst_18 = arith.constant dense<0.000000e+00> : vector<4xf32>
    %31 = vector.multi_reduction <add>, %30, %cst_18 [1] : vector<4x256xf32> to vector<4xf32>
    %32 = vector.shape_cast %31 : vector<4xf32> to vector<4x1xf32>
    %33 = arith.addf %29, %32 : vector<4x1xf32>
    %c0_19 = arith.constant 0 : index
    %c0_20 = arith.constant 0 : index
    %c0_21 = arith.constant 0 : index
    %34 = vector.load %arg5[%c0_19, %c0_20, %c0_21] : memref<1x4x1xf32, #tpu.memory_space<vmem>>, vector<1x4x1xf32>
    %35 = vector.shape_cast %34 : vector<1x4x1xf32> to vector<4x1xf32>
    %36 = vector.shape_cast %33 : vector<4x1xf32> to vector<1x4x1xf32>
    tpu.vector_store %arg5[%c0_19, %c0_20, %c0_21], %36 {strides = array<i32>} : memref<1x4x1xf32, #tpu.memory_space<vmem>>, vector<1x4x1xf32>,
    return
  }
  func.func @transform_0(%arg0: i32, %arg1: i32) -> (i32, i32, i32) {
    %c0_i32 = arith.constant 0 : i32
    %c0_i32_0 = arith.constant 0 : i32
    return %arg0, %c0_i32, %arg1 : i32, i32, i32
  }
  func.func @transform_1(%arg0: i32, %arg1: i32) -> (i32, i32, i32) {
    %c0_i32 = arith.constant 0 : i32
    %c0_i32_0 = arith.constant 0 : i32
    return %arg0, %c0_i32, %arg1 : i32, i32, i32
  }
  func.func @transform_2(%arg0: i32, %arg1: i32) -> (i32, i32, i32) {
    %c0_i32 = arith.constant 0 : i32
    %c0_i32_0 = arith.constant 0 : i32
    %c0_i32_1 = arith.constant 0 : i32
    return %arg0, %c0_i32, %c0_i32_0 : i32, i32, i32
  }
  func.func @transform_3(%arg0: i32, %arg1: i32) -> (i32, i32, i32) {
    %c0_i32 = arith.constant 0 : i32
    %c0_i32_0 = arith.constant 0 : i32
    %c0_i32_1 = arith.constant 0 : i32
    return %arg0, %c0_i32, %c0_i32_0 : i32, i32, i32
  }
}

</mosaic_0001>

<llo_original>
// kernel: tpu_custom_call.1
$region0: #{tpu_custom_call.1}
  #allocation0 [shape = 'u32[]', space=smem, size = 0x4, offset = 0x4, fixed_abs, tag = 'smem constant byte address 0x4 - core index']
  #allocation1 [shape = 'u32[144,128]{1,0:T(1,128)}', space=vmem, size = 0x12000, scoped, tag = 'internal scratch']
  %s0 = inlined_call_operand.hbm [shape: f32[2,4,256], index: 0, kind: input, shape index: {}]
  %s1 = inlined_call_operand.hbm [shape: f32[2,4,256], index: 1, kind: input, shape index: {}]
  %s2 = inlined_call_operand.vmem [shape: f32[2,4,1], index: 2, kind: output, shape index: {0}]
  %s3 = inlined_call_operand.vmem [shape: f32[2,4,1], index: 3, kind: output, shape index: {1}]
  %4 = xla_tuple %s2, %s3
  %s5 = sld [smem:[#allocation0]]
  $region61: #{tpu_custom_call.1} parent=0
    _
  %s7 = ssub.s32 1, %s5
  %s8 = scalar_select 0, %s7, %s5
  $region1: #{tpu_custom_call.1} parent=0
    #allocation2 [shape = 'u8[8192]{0}', space=vmem, size = 0x2000, scoped, tag = 'input window, operand 0']
    #allocation3 [shape = 's32[2]{0}', space=sflag, size = 0x8, scoped, tag = 'scoped memory for tpu_custom_call.1']
    #allocation4 [shape = 'u8[8192]{0}', space=vmem, size = 0x2000, scoped, tag = 'input window, operand 1']
    #allocation5 [shape = 's32[2]{0}', space=sflag, size = 0x8, scoped, tag = 'scoped memory for tpu_custom_call.1']
    %9 = vsyncpa [#allocation3], 0
    %s10 = scalar_lea.sflag [#allocation3], 1
    %11 = vsyncpa %s10, 0
    %12 = vsyncpa [#allocation5], 0
    %s13 = scalar_lea.sflag [#allocation5], 1
    %14 = vsyncpa %s13, 0
    loop: start=0, step=1, limit=4
    $region2: #{tpu_custom_call.1} parent=1 // loop_pre_header
      _
    $region3: #{tpu_custom_call.1} parent=1 // loop_header
      %s16 = sphi 0, %s20
      %p17 = scmp.ge.s32.totalorder %s16, 4
      %s23 = sphi 0, %s35
      %s24 = sphi 0, %s31
      %s25 = sphi 0, %s23
      %s26 = sphi 0, %s24
      %s27 = sphi 0, %s25
      %s28 = sphi 0, %s26
      %s40 = sphi 0, %s42
      %s43 = sphi 0, %s40
      %s44 = sphi 0, %s43
      %s60 = sphi 0, %s44
      %s68 = sphi 0, %s70
      %s71 = sphi 0, %s68
      %s72 = sphi 0, %s71
      %s88 = sphi 0, %s72
      %s94 = sphi 0, %s96
      %s97 = sphi 0, %s94
      %s98 = sphi 0, %s97
      %s114 = sphi 0, %s98
      %s120 = sphi 0, %s122
      %s123 = sphi 0, %s120
      %s124 = sphi 0, %s123
      %s140 = sphi 0, %s124
    $region4: #{tpu_custom_call.1} parent=1 // loop_header_branch
      %19 = sbr.rel (%p17) target = $region8
    $region5: #{tpu_custom_call.1} parent=1 // loop_body
      %s21 = ssub.s32 %s16, 1
      %s22 = ssub.s32 %s16, 2
      %s29 = sadd.s32 1, %s24
      %p30 = scmp.ge.s32.totalorder %s29, 1
      %s31 = scalar_select %p30, 0, %s29
      %s32 = sadd.s32 1, %s23
      %s33 = scalar_select %p30, %s32, %s23
      %p34 = scmp.ge.s32.totalorder %s33, 2
      %s35 = scalar_select %p34, 0, %s33
      %s36 = ssub.s32 %s23, %s35
      %s37 = ssub.s32 %s24, %s31
      %s38 = sor.u32 %s36, %s37
      %p39 = scmp.eq.s32.totalorder %s38, 0
      %s41 = sadd.s32 %s40, 1
      %s42 = scalar_select %p39, %s40, %s41
      %p45 = pneg %p39
      %p46 = scmp.eq.s32.totalorder %s16, 1
      %p47 = por %p45, %p46
      %p48 = scmp.ne.s32.totalorder %s40, %s43
      %p49 = scmp.eq.s32.totalorder %s16, 0
      %p50 = por %p48, %p49
      %p51 = scmp.ne.s32.totalorder %s40, %s43
      %p52 = scmp.eq.s32.totalorder %s21, 1
      %p53 = por %p51, %p52
      %p54 = scmp.ne.s32.totalorder %s43, %s44
      %p55 = scmp.eq.s32.totalorder %s21, 0
      %p56 = por %p54, %p55
      %p57 = scmp.ne.s32.totalorder %s43, %s44
      %p58 = scmp.eq.s32.totalorder %s22, 1
      %p59 = por %p57, %p58
      %p61 = scmp.ne.s32.totalorder %s44, %s60
      %p62 = scmp.eq.s32.totalorder %s22, 0
      %p63 = por %p61, %p62
      %s64 = ssub.s32 %s23, %s35
      %s65 = ssub.s32 %s24, %s31
      %s66 = sor.u32 %s64, %s65
      %p67 = scmp.eq.s32.totalorder %s66, 0
      %s69 = sadd.s32 %s68, 1
      %s70 = scalar_select %p67, %s68, %s69
      %p73 = pneg %p67
      %p74 = scmp.eq.s32.totalorder %s16, 1
      %p75 = por %p73, %p74
      %p76 = scmp.ne.s32.totalorder %s68, %s71
      %p77 = scmp.eq.s32.totalorder %s16, 0
      %p78 = por %p76, %p77
      %p79 = scmp.ne.s32.totalorder %s68, %s71
      %p80 = scmp.eq.s32.totalorder %s21, 1
      %p81 = por %p79, %p80
      %p82 = scmp.ne.s32.totalorder %s71, %s72
      %p83 = scmp.eq.s32.totalorder %s21, 0
      %p84 = por %p82, %p83
      %p85 = scmp.ne.s32.totalorder %s71, %s72
      %p86 = scmp.eq.s32.totalorder %s22, 1
      %p87 = por %p85, %p86
      %p89 = scmp.ne.s32.totalorder %s72, %s88
      %p90 = scmp.eq.s32.totalorder %s22, 0
      %p91 = por %p89, %p90
      %s92 = ssub.s32 %s23, %s35
      %p93 = scmp.eq.s32.totalorder %s92, 0
      %s95 = sadd.s32 %s94, 1
      %s96 = scalar_select %p93, %s94, %s95
      %p99 = pneg %p93
      %p100 = scmp.eq.s32.totalorder %s16, 1
      %p101 = por %p99, %p100
      %p102 = scmp.ne.s32.totalorder %s94, %s97
      %p103 = scmp.eq.s32.totalorder %s16, 0
      %p104 = por %p102, %p103
      %p105 = scmp.ne.s32.totalorder %s94, %s97
      %p106 = scmp.eq.s32.totalorder %s21, 1
      %p107 = por %p105, %p106
      %p108 = scmp.ne.s32.totalorder %s97, %s98
      %p109 = scmp.eq.s32.totalorder %s21, 0
      %p110 = por %p108, %p109
      %p111 = scmp.ne.s32.totalorder %s97, %s98
      %p112 = scmp.eq.s32.totalorder %s22, 1
      %p113 = por %p111, %p112
      %p115 = scmp.ne.s32.totalorder %s98, %s114
      %p116 = scmp.eq.s32.totalorder %s22, 0
      %p117 = por %p115, %p116
      %s118 = ssub.s32 %s23, %s35
      %p119 = scmp.eq.s32.totalorder %s118, 0
      %s121 = sadd.s32 %s120, 1
      %s122 = scalar_select %p119, %s120, %s121
      %p125 = pneg %p119
      %p126 = scmp.eq.s32.totalorder %s16, 1
      %p127 = por %p125, %p126
      %p128 = scmp.ne.s32.totalorder %s120, %s123
      %p129 = scmp.eq.s32.totalorder %s16, 0
      %p130 = por %p128, %p129
      %p131 = scmp.ne.s32.totalorder %s120, %s123
      %p132 = scmp.eq.s32.totalorder %s21, 1
      %p133 = por %p131, %p132
      %p134 = scmp.ne.s32.totalorder %s123, %s124
      %p135 = scmp.eq.s32.totalorder %s21, 0
      %p136 = por %p134, %p135
      %p137 = scmp.ne.s32.totalorder %s123, %s124
      %p138 = scmp.eq.s32.totalorder %s22, 1
      %p139 = por %p137, %p138
      %p141 = scmp.ne.s32.totalorder %s124, %s140
      %p142 = scmp.eq.s32.totalorder %s22, 0
      %p143 = por %p141, %p142
      %p144 = scmp.le.s32.totalorder 1, %s16
      %p145 = scmp.lt.s32.totalorder %s16, 3
      %p146 = pnand %p144, %p145
      %p147 = pneg %p146
      // Predicated region
      $region9: #{tpu_custom_call.1} parent=5 // pred_check
        _
      $region10: #{tpu_custom_call.1} parent=5 // pred_check_branch
        %149 = sbr.rel (%p146) target = $region12
      $region11: #{tpu_custom_call.1} parent=5 // pred_region
        %s150 = ssub.s32 %s16, 1
      $region12: #{tpu_custom_call.1} parent=5 // pred_fallthru
        _
      %p151 = scmp.lt.s32.totalorder %s16, 2
      // Predicated region
      $region13: #{tpu_custom_call.1} parent=5 // pred_check
        %p152 = pneg %p151
      $region14: #{tpu_custom_call.1} parent=5 // pred_check_branch
        %154 = sbr.rel (%p152) target = $region16
      $region15: #{tpu_custom_call.1} parent=5 // pred_region
        // Predicated region
        $region17: #{tpu_custom_call.1} parent=15 // pred_check
          %p155 = pneg %p50
        $region18: #{tpu_custom_call.1} parent=15 // pred_check_branch
          %157 = sbr.rel (%p155) target = $region20
        $region19: #{tpu_custom_call.1} parent=15 // pred_region
          %s158 = sand.u32 %s40, 1
          %s159 = scalar_lea.sflag [#allocation3], %s158
          %s160 = sand.u32 %s40, 1
          %s161 = smul.addr %s160, 8
          %s162 = scalar_lea.vmem [#allocation2], %s161
          %s163 = smul.u32 2, %s24
          %s165 = ssub.s32 128, 128
          %166 = vsyncadd %s159, %s165
          %s167 = smul.addr %s23, 2
          %s168 = sadd.s32 %s163, %s167
          %s169 = smul.addr %s168, 64
          %s170 = scalar_lea.hbm %s0, %s169
          %s172 = sshll.u32 %s162, 4
          %s173 = int_to_ptr.vmem [resolvable:$true] %s172
          %175 = dma.hbm_to_vmem [thread:$0]  %s170, 128, %s173, %s159
        $region20: #{tpu_custom_call.1} parent=15 // pred_fallthru
          _
        // Predicated region
        $region21: #{tpu_custom_call.1} parent=15 // pred_check
          %p176 = pneg %p78
        $region22: #{tpu_custom_call.1} parent=15 // pred_check_branch
          %178 = sbr.rel (%p176) target = $region24
        $region23: #{tpu_custom_call.1} parent=15 // pred_region
          %s179 = sand.u32 %s68, 1
          %s180 = scalar_lea.sflag [#allocation5], %s179
          %s181 = sand.u32 %s68, 1
          %s182 = smul.addr %s181, 8
          %s183 = scalar_lea.vmem [#allocation4], %s182
          %s184 = smul.u32 2, %s24
          %s186 = ssub.s32 128, 128
          %187 = vsyncadd %s180, %s186
          %s188 = smul.addr %s23, 2
          %s189 = sadd.s32 %s184, %s188
          %s190 = smul.addr %s189, 64
          %s191 = scalar_lea.hbm %s1, %s190
          %s193 = sshll.u32 %s183, 4
          %s194 = int_to_ptr.vmem [resolvable:$true] %s193
          %196 = dma.hbm_to_vmem [thread:$0]  %s191, 128, %s194, %s180
        $region24: #{tpu_custom_call.1} parent=15 // pred_fallthru
          _
      $region16: #{tpu_custom_call.1} parent=5 // pred_fallthru
        _
      %p197 = scmp.le.s32.totalorder 1, %s16
      %p198 = scmp.lt.s32.totalorder %s16, 3
      %p199 = pnand %p197, %p198
      %p200 = pneg %p199
      // Predicated region
      $region25: #{tpu_custom_call.1} parent=5 // pred_check
        _
      $region26: #{tpu_custom_call.1} parent=5 // pred_check_branch
        %202 = sbr.rel (%p199) target = $region28
      $region27: #{tpu_custom_call.1} parent=5 // pred_region
        %s203 = ssub.s32 %s16, 1
        %s204 = sand.u32 %s43, 1
        %s205 = scalar_lea.sflag [#allocation3], %s204
        %s206 = sand.u32 %s43, 1
        %s207 = smul.addr %s206, 8
        %s208 = scalar_lea.vmem [#allocation2], %s207
        // Predicated region
        $region29: #{tpu_custom_call.1} parent=27 // pred_check
          %p209 = pneg %p56
        $region30: #{tpu_custom_call.1} parent=27 // pred_check_branch
          %211 = sbr.rel (%p209) target = $region32
        $region31: #{tpu_custom_call.1} parent=27 // pred_region
          %212 = dma.done %s205, 128
        $region32: #{tpu_custom_call.1} parent=27 // pred_fallthru
          _
        %s213 = sand.u32 %s71, 1
        %s214 = scalar_lea.sflag [#allocation5], %s213
        %s215 = sand.u32 %s71, 1
        %s216 = smul.addr %s215, 8
        %s217 = scalar_lea.vmem [#allocation4], %s216
        // Predicated region
        $region33: #{tpu_custom_call.1} parent=27 // pred_check
          %p218 = pneg %p84
        $region34: #{tpu_custom_call.1} parent=27 // pred_check_branch
          %220 = sbr.rel (%p218) target = $region36
        $region35: #{tpu_custom_call.1} parent=27 // pred_region
          %221 = dma.done %s214, 128
        $region36: #{tpu_custom_call.1} parent=27 // pred_fallthru
          _
        %s222 = sand.u32 %s43, 1
        %s223 = scalar_lea.sflag [#allocation3], %s222
        %s224 = sand.u32 %s43, 1
        %s225 = smul.addr %s224, 8
        %s226 = scalar_lea.vmem [#allocation2], %s225
        %p227 = pneg %p56
        %p228 = pneg %p53
        %s229 = sand.u32 %s71, 1
        %s230 = scalar_lea.sflag [#allocation5], %s229
        %s231 = sand.u32 %s71, 1
        %s232 = smul.addr %s231, 8
        %s233 = scalar_lea.vmem [#allocation4], %s232
        %p234 = pneg %p84
        %p235 = pneg %p81
        %p236 = pneg %p110
        %p237 = pneg %p107
        %p238 = scmp.lt.s32.totalorder %s25, 1
        %s239 = scalar_select %p238, %s25, 1
        %s240 = smul.addr %s239, 4
        %s241 = scalar_lea.vmem %s2, %s240
        %p242 = pneg %p136
        %p243 = pneg %p133
        %p244 = scmp.lt.s32.totalorder %s25, 1
        %s245 = scalar_select %p244, %s25, 1
        %s246 = smul.addr %s245, 4
        %s247 = scalar_lea.vmem %s3, %s246
        %s248 = smul.u32 2, %s26
        %s249 = smul.u32 2, %s26
        %p250 = scmp.lt.s32.totalorder %s25, 1
        %s251 = scalar_select %p250, %s25, 1
        %s252 = smul.addr %s251, 4
        %s253 = scalar_lea.vmem %s2, %s252
        %p254 = scmp.lt.s32.totalorder %s25, 1
        %s255 = scalar_select %p254, %s25, 1
        %s256 = smul.addr %s255, 4
        %s257 = scalar_lea.vmem %s3, %s256
        %p258 = scmp.eq.s32.totalorder %s26, 0
        // Predicated region
        $region37: #{tpu_custom_call.1} parent=27 // pred_check
          %p259 = pneg %p258
        $region38: #{tpu_custom_call.1} parent=27 // pred_check_branch
          %261 = sbr.rel (%p259) target = $region40
        $region39: #{tpu_custom_call.1} parent=27 // pred_region
          %vm262 = vcmask 3072
          %263 = vst.msk [vmem:[%s253] sm:$0xf] %vm262, 0.0
          %264 = vst.msk [vmem:[%s257] sm:$0xf] %vm262, 0.0
        $region40: #{tpu_custom_call.1} parent=27 // pred_fallthru
          _
        %v265 = vld [vmem:[%s208] sm:$0xff]
        %v266 = vld [vmem:[%s217] sm:$0xff]
        %v268 = vcombine.high %v265, %v265
        %vm270 = vcmask 1043456
        %v271 = vsel %vm270, %v265, -inf
        %v272 = vrot.slane %v271, 4
        %v273 = vmax.f32 %v271, %v272
        %v274 = vrot.slane %v273, 2
        %v275 = vmax.f32 %v273, %v274
        %v276 = vrot.slane %v275, 1
        %v277 = vmax.f32 %v275, %v276
        %v278 = vsel %vm270, %v268, -inf
        %v279 = vrot.slane %v278, 4
        %v280 = vmax.f32 %v278, %v279
        %v281 = vrot.slane %v280, 2
        %v282 = vmax.f32 %v280, %v281
        %v283 = vrot.slane %v282, 1
        %v284 = vmax.f32 %v282, %v283
        %v287 = vcombine.low %v277, %v284
        %v289 = vsub.f32 %v265, %v287
        %v290 = vmul.f32 %v289, 1.442695
        %v291 = vpow.pop %v290
        %v293 = vcombine.high %v291, %v291
        %v295 = vsel %vm270, %v291, 0.0
        %v296 = vrot.slane %v295, 4
        %v297 = vadd.f32 %v295, %v296
        %v298 = vrot.slane %v297, 2
        %v299 = vadd.f32 %v297, %v298
        %v300 = vrot.slane %v299, 1
        %v301 = vadd.f32 %v299, %v300
        %v302 = vsel %vm270, %v293, 0.0
        %v303 = vrot.slane %v302, 4
        %v304 = vadd.f32 %v302, %v303
        %v305 = vrot.slane %v304, 2
        %v306 = vadd.f32 %v304, %v305
        %v307 = vrot.slane %v306, 1
        %v308 = vadd.f32 %v306, %v307
        %v309 = vrcp.pop %v301
        %v310 = vrcp.pop %v308
        %v313 = vcombine.low %v309, %v310
        %v315 = vmul.f32 %v291, %v313
        %v316 = vld [vmem:[%s253] sm:$0xf]
        %v317 = vmul.f32 %v315, %v266
        %v319 = vcombine.high %v317, %v317
        %v321 = vsel %vm270, %v317, 0.0
        %v322 = vsel %vm270, %v319, 0.0
        %v323 = vadd.f32 %v321, %v322
        %324 = vadd.xlane.f32.xlu0 %v323
        %v325 = vpop.xlane.xlu0 %324
        %v326 = vmul.f32 %v325, 2.0
        %v327 = vadd.f32 %v316, %v326
        %vm328 = vcmask 3072
        %329 = vst.msk [vmem:[%s253] sm:$0xf] %vm328, %v327
        %v330 = vld [vmem:[%s257] sm:$0xf]
        %v331 = vadd.f32 %v315, %v266
        %v333 = vcombine.high %v331, %v331
        %v335 = vsel %vm270, %v331, 0.0
        %v336 = vsel %vm270, %v333, 0.0
        %v337 = vadd.f32 %v335, %v336
        %338 = vadd.xlane.f32.xlu0 %v337
        %v339 = vpop.xlane.xlu0 %338
        %v340 = vadd.f32 %v330, %v339
        %341 = vst.msk [vmem:[%s257] sm:$0xf] %vm328, %v340
        %p342 = scmp.lt.s32.totalorder %s25, 1
        %s343 = scalar_select %p342, %s25, 1
        %s344 = smul.addr %s343, 4
        %s345 = scalar_lea.vmem %s2, %s344
        %p346 = scmp.lt.s32.totalorder %s25, 1
        %s347 = scalar_select %p346, %s25, 1
        %s348 = smul.addr %s347, 4
        %s349 = scalar_lea.vmem %s3, %s348
        // Predicated region
        $region41: #{tpu_custom_call.1} parent=27 // pred_check
          %p350 = pneg %p107
        $region42: #{tpu_custom_call.1} parent=27 // pred_check_branch
          %352 = sbr.rel (%p350) target = $region44
        $region43: #{tpu_custom_call.1} parent=27 // pred_region
          _
        $region44: #{tpu_custom_call.1} parent=27 // pred_fallthru
          _
        // Predicated region
        $region45: #{tpu_custom_call.1} parent=27 // pred_check
          %p353 = pneg %p133
        $region46: #{tpu_custom_call.1} parent=27 // pred_check_branch
          %355 = sbr.rel (%p353) target = $region48
        $region47: #{tpu_custom_call.1} parent=27 // pred_region
          _
        $region48: #{tpu_custom_call.1} parent=27 // pred_fallthru
          _
      $region28: #{tpu_custom_call.1} parent=5 // pred_fallthru
        _
      %p356 = scmp.le.s32.totalorder 2, %s16
      // Predicated region
      $region49: #{tpu_custom_call.1} parent=5 // pred_check
        %p357 = pneg %p356
      $region50: #{tpu_custom_call.1} parent=5 // pred_check_branch
        %359 = sbr.rel (%p357) target = $region52
      $region51: #{tpu_custom_call.1} parent=5 // pred_region
        %s360 = ssub.s32 %s16, 2
        // Predicated region
        $region53: #{tpu_custom_call.1} parent=51 // pred_check
          %p361 = pneg %p113
        $region54: #{tpu_custom_call.1} parent=51 // pred_check_branch
          %363 = sbr.rel (%p361) target = $region56
        $region55: #{tpu_custom_call.1} parent=51 // pred_region
          %p364 = scmp.lt.s32.totalorder %s27, 1
          %s365 = scalar_select %p364, %s27, 1
          %s366 = smul.addr %s365, 4
          %s367 = scalar_lea.vmem %s2, %s366
        $region56: #{tpu_custom_call.1} parent=51 // pred_fallthru
          _
        // Predicated region
        $region57: #{tpu_custom_call.1} parent=51 // pred_check
          %p368 = pneg %p139
        $region58: #{tpu_custom_call.1} parent=51 // pred_check_branch
          %370 = sbr.rel (%p368) target = $region60
        $region59: #{tpu_custom_call.1} parent=51 // pred_region
          %p371 = scmp.lt.s32.totalorder %s27, 1
          %s372 = scalar_select %p371, %s27, 1
          %s373 = smul.addr %s372, 4
          %s374 = scalar_lea.vmem %s3, %s373
        $region60: #{tpu_custom_call.1} parent=51 // pred_fallthru
          _
      $region52: #{tpu_custom_call.1} parent=5 // pred_fallthru
        _
    $region6: #{tpu_custom_call.1} parent=1 // loop_footer
      %s20 = sadd.s32 1, %s16
    $region7: #{tpu_custom_call.1} parent=1 // loop_footer_branch
      %15 = sbr.rel target = $region3
    $region8: #{tpu_custom_call.1} parent=1 // loop_exit
      _
    %375 = vsyncpa [#allocation3], 1
    %s376 = scalar_lea.sflag [#allocation3], 1
    %377 = vsyncpa %s376, 1
    %378 = vsyncpa [#allocation5], 1
    %s379 = scalar_lea.sflag [#allocation5], 1
    %380 = vsyncpa %s379, 1

</llo_original>
